<compile_context>
chip_gen: v5e
topology: v5e:2x2
jax: 0.10.0
libtpu: 0.0.40
codegen_flags: <defaults>
</compile_context>

<pallas_src>
import jax
import jax.numpy as jnp
from jax.experimental import pallas as pl
from jax.experimental.pallas import tpu as pltpu


def _round_up(x, m):
    return (x + m - 1) // m * m


# -----------------------------------------------------------------------------
# One-time parameter preparation (host side, cache the result).
# -----------------------------------------------------------------------------
def prepare_fused_params(wc, bc, wa, ba, wb, bb, weight_dtype=jnp.bfloat16):
    """Build the fused, lane-aligned weight / bias ONCE.

    Column layout (each head padded independently to a multiple of 128 so each
    head's output block is lane-dense and boundaries are 128-aligned):
        [ cls | pad | attr | pad | bbox | pad ]

    Returns:
        w_fused: (C, O_pad) weight_dtype (bf16) — MXU-native orientation.
        b_fused: (1, O_pad) float32.
        meta:    dict with true / padded head widths.
    """
    ncls, nattr, nbox = wc.shape[0], wa.shape[0], wb.shape[0]
    ncls_p = _round_up(ncls, 128)
    nattr_p = _round_up(nattr, 128)
    nbox_p = _round_up(nbox, 128)

    def _pad_head(w, b, o_p):
        w = jnp.pad(w, ((0, o_p - w.shape[0]), (0, 0)))
        b = jnp.pad(b, ((0, o_p - b.shape[0]),))
        return w, b

    wc_p, bc_p = _pad_head(wc, bc, ncls_p)
    wa_p, ba_p = _pad_head(wa, ba, nattr_p)
    wb_p, bb_p = _pad_head(wb, bb, nbox_p)

    # TODO(synk): optional per-chip low-precision weight path (int8 on v5e/v6e,
    # fp8 on v7x) with per-output-channel scales folded into the bias epilogue.
    w_fused = jnp.concatenate([wc_p, wa_p, wb_p], axis=0).T.astype(weight_dtype)
    b_fused = jnp.concatenate([bc_p, ba_p, bb_p], axis=0).reshape(1, -1)
    b_fused = b_fused.astype(jnp.float32)

    meta = dict(ncls=ncls, nattr=nattr, nbox=nbox,
                ncls_p=ncls_p, nattr_p=nattr_p, nbox_p=nbox_p)
    return w_fused, b_fused, meta


# -----------------------------------------------------------------------------
# Kernel: one N-tile of the fused three-head linear.
# -----------------------------------------------------------------------------
def _fused_predictor_kernel(x_ref, w_ref, b_ref, cls_ref, attr_ref, bbox_ref):
    """out[i] = x_tile @ w_fused + b_fused, split into three lane-dense heads.

    x_ref:    (TN, C)      f32   streamed along the N grid axis
    w_ref:    (C, O_pad)   bf16  constant index_map -> fetched once, resident
    b_ref:    (1, O_pad)   f32   constant index_map -> resident
    cls_ref:  (TN, ncls_p) f32
    attr_ref: (TN, nattr_p) f32
    bbox_ref: (TN, nbox_p) f32
    """
    # Cast on-chip: avoids a separate wrapper astype pass over x in HBM.
    x_bf16 = x_ref[...].astype(jnp.bfloat16)
    acc = jnp.dot(x_bf16, w_ref[...], preferred_element_type=jnp.float32)
    acc = acc + b_ref[...]

    ncls_p = cls_ref.shape[-1]
    nattr_p = attr_ref.shape[-1]
    # 128-aligned column splits of a VMEM value: lane-dense, no masked stores.
    cls_ref[...] = acc[:, :ncls_p]
    attr_ref[...] = acc[:, ncls_p:ncls_p + nattr_p]
    bbox_ref[...] = acc[:, ncls_p + nattr_p:]


# -----------------------------------------------------------------------------
# Forward with pre-fused (cached) parameters — the hot path.
# -----------------------------------------------------------------------------
def fast_rcnn_predictor_fused(x, w_fused, b_fused, meta):
    if x.ndim == 4:
        assert x.shape[2] == 1 and x.shape[3] == 1, "expected [*, *, 1, 1]"
    x2d = x.reshape(x.shape[0], -1)  # flatten(start_dim=1)

    n, c = x2d.shape
    ncls, nattr, nbox = meta["ncls"], meta["nattr"], meta["nbox"]
    ncls_p, nattr_p, nbox_p = meta["ncls_p"], meta["nattr_p"], meta["nbox_p"]
    o_pad = ncls_p + nattr_p + nbox_p
    assert w_fused.shape == (c, o_pad)

    if n == 0:  # no proposals: zero-sized blocks are not representable
        z = jnp.zeros
        return (z((0, ncls), jnp.float32), z((0, nattr), jnp.float32),
                z((0, nbox), jnp.float32))

    # ---- N tiling: bounds VMEM independent of batch, feeds v7x megacore. ----
    tile_n = _round_up(n, 8) if n <= 256 else 256
    n_pad = _round_up(n, tile_n)
    if n_pad != n:
        x2d = jnp.pad(x2d, ((0, n_pad - n), (0, 0)))
    num_n_tiles = n_pad // tile_n

    # ---- Explicit VMEM budget (v5e scoped default is only 16 MiB). ----------
    vmem_bytes = (2 * tile_n * c * 4            # x tiles (f32, double-buffered)
                  + 2 * c * o_pad * 2           # fused weight (bf16, 2 bufs)
                  + 2 * o_pad * 4               # bias
                  + 2 * tile_n * o_pad * 4)     # output head tiles (f32)
    # TODO(synk): mark the constant-index weight/bias specs pl.Buffered(1) to
    # reclaim their second buffer on VMEM-tight chips (v7x, 64 MiB).
    vmem_limit = min(max(int(1.5 * vmem_bytes) + (2 << 20), 32 << 20), 64 << 20)

    cost = pl.CostEstimate(
        flops=2 * n_pad * c * o_pad,
        transcendentals=0,
        bytes_accessed=(n_pad * c * 4           # x (f32, cast on-chip)
                        + c * o_pad * 2         # fused weight (bf16, read once)
                        + o_pad * 4             # bias
                        + n_pad * o_pad * 4),   # outputs (f32)
    )

    grid = (num_n_tiles,)
    cls_p, attr_p, bbox_p = pl.pallas_call(
        _fused_predictor_kernel,
        grid=grid,
        in_specs=[
            # x streamed along the N grid axis.
            pl.BlockSpec((tile_n, c), lambda i: (i, 0)),
            # Fused weight / bias: constant block index -> fetched once.
            pl.BlockSpec((c, o_pad), lambda i: (0, 0)),
            pl.BlockSpec((1, o_pad), lambda i: (0, 0)),
        ],
        out_specs=(
            pl.BlockSpec((tile_n, ncls_p), lambda i: (i, 0)),
            pl.BlockSpec((tile_n, nattr_p), lambda i: (i, 0)),
            pl.BlockSpec((tile_n, nbox_p), lambda i: (i, 0)),
        ),
        out_shape=(
            jax.ShapeDtypeStruct((n_pad, ncls_p), jnp.float32),
            jax.ShapeDtypeStruct((n_pad, nattr_p), jnp.float32),
            jax.ShapeDtypeStruct((n_pad, nbox_p), jnp.float32),
        ),
        compiler_params=pltpu.CompilerParams(
            dimension_semantics=("parallel",),
            vmem_limit_bytes=vmem_limit),
        cost_estimate=cost,
    )(x2d, w_fused, b_fused)

    # Only per-head padding (<=127 cols) and padded rows are trimmed here; the
    # head boundaries are already 128-aligned and written lane-dense.
    scores = cls_p[:n, :ncls]
    attrs = attr_p[:n, :nattr]
    bbox = bbox_p[:n, :nbox]
    return scores, attrs, bbox


# -----------------------------------------------------------------------------
# Convenience wrapper matching the original (un-fused) signature.
# Prefer calling prepare_fused_params once and using the fused path directly.
# -----------------------------------------------------------------------------
def fast_rcnn_predictor(x, wc, bc, wa, ba, wb, bb):
    w_fused, b_fused, meta = prepare_fused_params(wc, bc, wa, ba, wb, bb)
    return fast_rcnn_predictor_fused(x, w_fused, b_fused, meta)


def init_params(key, in_channels, num_classes, num_attributes):
    """Deterministic synthetic parameters (PyTorch Linear weight layout)."""
    ks = jax.random.split(key, 6)
    scale = 1.0 / jnp.sqrt(jnp.float32(in_channels))
    wc = jax.random.uniform(ks[0], (num_classes, in_channels),
                            minval=-scale, maxval=scale, dtype=jnp.float32)
    bc = jax.random.uniform(ks[1], (num_classes,),
                            minval=-scale, maxval=scale, dtype=jnp.float32)
    wa = jax.random.uniform(ks[2], (num_attributes, in_channels),
                            minval=-scale, maxval=scale, dtype=jnp.float32)
    ba = jax.random.uniform(ks[3], (num_attributes,),
                            minval=-scale, maxval=scale, dtype=jnp.float32)
    wb = jax.random.uniform(ks[4], (num_classes * 4, in_channels),
                            minval=-scale, maxval=scale, dtype=jnp.float32)
    bb = jax.random.uniform(ks[5], (num_classes * 4,),
                            minval=-scale, maxval=scale, dtype=jnp.float32)
    return wc, bc, wa, ba, wb, bb


if __name__ == "__main__":
    key = jax.random.PRNGKey(0)
    k_x, k_p = jax.random.split(key)

    batch = 2
    in_channels = 32
    num_classes = 8
    num_attributes = 16

    # RoI-pooled features, PyTorch shape (N, C, 1, 1).
    x = jax.random.normal(k_x, (batch, in_channels, 1, 1), dtype=jnp.float32)
    wc, bc, wa, ba, wb, bb = init_params(k_p, in_channels, num_classes,
                                         num_attributes)

    # One-time weight prep (cached across forward calls).
    w_fused, b_fused, meta = prepare_fused_params(wc, bc, wa, ba, wb, bb)
    jax.block_until_ready((w_fused, b_fused))

    scores, attrs, bbox = fast_rcnn_predictor_fused(x, w_fused, b_fused, meta)
    jax.block_until_ready((scores, attrs, bbox))

    # Pure-JAX f32 reference (same math as nn.Linear). The kernel computes the
    # matmul in bf16 with f32 accumulation, so compare with loosened tolerance.
    x2d = x.reshape(batch, -1)
    ref_scores = x2d @ wc.T + bc
    ref_attrs = x2d @ wa.T + ba
    ref_bbox = x2d @ wb.T + bb
    assert scores.shape == (batch, num_classes)
    assert attrs.shape == (batch, num_attributes)
    assert bbox.shape == (batch, num_classes * 4)
    assert jnp.allclose(scores, ref_scores, rtol=2e-2, atol=2e-2)
    assert jnp.allclose(attrs, ref_attrs, rtol=2e-2, atol=2e-2)
    assert jnp.allclose(bbox, ref_bbox, rtol=2e-2, atol=2e-2)

    print("KERNEL_OK")
</pallas_src>

<mosaic_0001>
module attributes {stable_mosaic.version = 11 : i64} {
  func.func @_fused_predictor_kernel(%arg0: i32, %arg1: memref<8x32xf32, #tpu.memory_space<vmem>>, %arg2: memref<32x384xbf16, #tpu.memory_space<vmem>>, %arg3: memref<1x384xf32, #tpu.memory_space<vmem>>, %arg4: memref<8x128xf32, #tpu.memory_space<vmem>>, %arg5: memref<8x128xf32, #tpu.memory_space<vmem>>, %arg6: memref<8x128xf32, #tpu.memory_space<vmem>>) attributes {dimension_semantics = [#tpu.dimension_semantics<parallel>], iteration_bounds = array<i64: 1>, scalar_prefetch = 0 : i64, scratch_operands = 0 : i64, tpu.core_type = #tpu.core_type<tc>, window_params = [{transform_indices = @transform_0, window_bounds = array<i64: 8, 32>}, {pipeline_mode = #tpu.pipeline_mode<synchronous>, transform_indices = @transform_1, window_bounds = array<i64: 32, 384>}, {pipeline_mode = #tpu.pipeline_mode<synchronous>, transform_indices = @transform_2, window_bounds = array<i64: 1, 384>}, {transform_indices = @transform_3, window_bounds = array<i64: 8, 128>}, {transform_indices = @transform_4, window_bounds = array<i64: 8, 128>}, {transform_indices = @transform_5, window_bounds = array<i64: 8, 128>}]} {
    %c0 = arith.constant 0 : index
    %c0_0 = arith.constant 0 : index
    %0 = vector.load %arg1[%c0, %c0_0] : memref<8x32xf32, #tpu.memory_space<vmem>>, vector<8x32xf32>
    %1 = arith.truncf %0 : vector<8x32xf32> to vector<8x32xbf16>
    %c0_1 = arith.constant 0 : index
    %c0_2 = arith.constant 0 : index
    %2 = vector.load %arg2[%c0_1, %c0_2] : memref<32x384xbf16, #tpu.memory_space<vmem>>, vector<32x384xbf16>
    %cst = arith.constant dense<0.000000e+00> : vector<8x384xf32>
    %3 = tpu.matmul %1, %2, %cst {dimension_numbers = #tpu.dot_dimension_numbers<[1], [0], [0], [1], [0, 0, 1, 1], [], []>} : vector<8x32xbf16>, vector<32x384xbf16>, vector<8x384xf32> -> vector<8x384xf32>
    %c0_3 = arith.constant 0 : index
    %c0_4 = arith.constant 0 : index
    %4 = vector.load %arg3[%c0_3, %c0_4] : memref<1x384xf32, #tpu.memory_space<vmem>>, vector<1x384xf32>
    %5 = vector.broadcast %4 : vector<1x384xf32> to vector<8x384xf32>
    %6 = arith.addf %3, %5 : vector<8x384xf32>
    %7 = vector.extract_strided_slice %6 {offsets = [0, 0], sizes = [8, 128], strides = [1, 1]} : vector<8x384xf32> to vector<8x128xf32>
    %c0_5 = arith.constant 0 : index
    %c0_6 = arith.constant 0 : index
    %8 = vector.load %arg4[%c0_5, %c0_6] : memref<8x128xf32, #tpu.memory_space<vmem>>, vector<8x128xf32>
    tpu.vector_store %arg4[%c0_5, %c0_6], %7 {strides = array<i32>} : memref<8x128xf32, #tpu.memory_space<vmem>>, vector<8x128xf32>,
    %9 = vector.extract_strided_slice %6 {offsets = [0, 128], sizes = [8, 128], strides = [1, 1]} : vector<8x384xf32> to vector<8x128xf32>
    %c0_7 = arith.constant 0 : index
    %c0_8 = arith.constant 0 : index
    %10 = vector.load %arg5[%c0_7, %c0_8] : memref<8x128xf32, #tpu.memory_space<vmem>>, vector<8x128xf32>
    tpu.vector_store %arg5[%c0_7, %c0_8], %9 {strides = array<i32>} : memref<8x128xf32, #tpu.memory_space<vmem>>, vector<8x128xf32>,
    %11 = vector.extract_strided_slice %6 {offsets = [0, 256], sizes = [8, 128], strides = [1, 1]} : vector<8x384xf32> to vector<8x128xf32>
    %c0_9 = arith.constant 0 : index
    %c0_10 = arith.constant 0 : index
    %12 = vector.load %arg6[%c0_9, %c0_10] : memref<8x128xf32, #tpu.memory_space<vmem>>, vector<8x128xf32>
    tpu.vector_store %arg6[%c0_9, %c0_10], %11 {strides = array<i32>} : memref<8x128xf32, #tpu.memory_space<vmem>>, vector<8x128xf32>,
    return
  }
  func.func @transform_0(%arg0: i32) -> (i32, i32) {
    %c0_i32 = arith.constant 0 : i32
    %c0_i32_0 = arith.constant 0 : i32
    return %arg0, %c0_i32 : i32, i32
  }
  func.func @transform_1(%arg0: i32) -> (i32, i32) {
    %c0_i32 = arith.constant 0 : i32
    %c0_i32_0 = arith.constant 0 : i32
    %c0_i32_1 = arith.constant 0 : i32
    return %c0_i32, %c0_i32_0 : i32, i32
  }
  func.func @transform_2(%arg0: i32) -> (i32, i32) {
    %c0_i32 = arith.constant 0 : i32
    %c0_i32_0 = arith.constant 0 : i32
    %c0_i32_1 = arith.constant 0 : i32
    return %c0_i32, %c0_i32_0 : i32, i32
  }
  func.func @transform_3(%arg0: i32) -> (i32, i32) {
    %c0_i32 = arith.constant 0 : i32
    %c0_i32_0 = arith.constant 0 : i32
    return %arg0, %c0_i32 : i32, i32
  }
  func.func @transform_4(%arg0: i32) -> (i32, i32) {
    %c0_i32 = arith.constant 0 : i32
    %c0_i32_0 = arith.constant 0 : i32
    return %arg0, %c0_i32 : i32, i32
  }
  func.func @transform_5(%arg0: i32) -> (i32, i32) {
    %c0_i32 = arith.constant 0 : i32
    %c0_i32_0 = arith.constant 0 : i32
    return %arg0, %c0_i32 : i32, i32
  }
}

</mosaic_0001>

<llo_original>
// kernel: tpu_custom_call.1
$region0: #{tpu_custom_call.1}
  #allocation0 [shape = 'u32[]', space=smem, size = 0x4, offset = 0x4, fixed_abs, tag = 'smem constant byte address 0x4 - core index']
  #allocation1 [shape = 'u32[72,128]{1,0:T(1,128)}', space=vmem, size = 0x9000, scoped, tag = 'internal scratch']
  %s0 = inlined_call_operand.hbm [shape: f32[8,32], index: 0, kind: input, shape index: {}]
  %s1 = inlined_call_operand.hbm [shape: bf16[32,384], index: 1, kind: input, shape index: {}]
  %s2 = inlined_call_operand.hbm [shape: f32[1,384], index: 2, kind: input, shape index: {}]
  %s3 = inlined_call_operand.hbm [shape: f32[8,128], index: 3, kind: output, shape index: {0}]
  %s4 = inlined_call_operand.hbm [shape: f32[8,128], index: 4, kind: output, shape index: {1}]
  %s5 = inlined_call_operand.hbm [shape: f32[8,128], index: 5, kind: output, shape index: {2}]
  %6 = xla_tuple %s3, %s4, %s5
  %s7 = sld [smem:[#allocation0]]
  $region50: #{tpu_custom_call.1} parent=0
    _
  %s9 = ssub.s32 1, %s7
  %s10 = scalar_select 0, %s9, %s7
  $region1: #{tpu_custom_call.1} parent=0
    #allocation2 [shape = 'u8[4096]{0}', space=vmem, size = 0x1000, scoped, tag = 'input window, operand 0, single buffered']
    #allocation3 [shape = 's32[1]{0}', space=sflag, size = 0x4, scoped, tag = 'scoped memory for tpu_custom_call.1']
    #allocation4 [shape = 's32[1]{0}', space=sflag, size = 0x4, scoped, tag = 'scoped memory for tpu_custom_call.1']
    #allocation5 [shape = 'u8[24576]{0}', space=vmem, size = 0x6000, scoped, tag = 'input window, operand 1, single buffered']
    #allocation6 [shape = 's32[1]{0}', space=sflag, size = 0x4, scoped, tag = 'scoped memory for tpu_custom_call.1']
    #allocation7 [shape = 'u8[1536]{0}', space=vmem, size = 0x800, scoped, tag = 'input window, operand 2, single buffered']
    #allocation8 [shape = 'u8[4096]{0}', space=vmem, size = 0x1000, scoped, tag = 'output window, operand 0, single buffered']
    #allocation9 [shape = 'u8[4096]{0}', space=vmem, size = 0x1000, scoped, tag = 'output window, operand 1, single buffered']
    #allocation10 [shape = 's32[1]{0}', space=sflag, size = 0x4, scoped, tag = 'scoped memory for tpu_custom_call.1']
    #allocation11 [shape = 'u8[4096]{0}', space=vmem, size = 0x1000, scoped, tag = 'output window, operand 2, single buffered']
    %11 = vsyncpa [#allocation3], 0
    %12 = vsyncpa [#allocation6], 0
    %13 = vsyncpa [#allocation4], 0
    %14 = vsyncpa [#allocation10], 0
    // Predicated region
    $region2: #{tpu_custom_call.1} parent=1 // pred_check
      _
    $region3: #{tpu_custom_call.1} parent=1 // pred_check_branch
      %16 = sbr.rel (0) target = $region5
    $region4: #{tpu_custom_call.1} parent=1 // pred_region
      %18 = vsyncadd [#allocation3], 0
      %s20 = sshll.u32 %s0, 4
      %s21 = int_to_ptr.hbm [resolvable:$true] %s20
      %s22 = sshll.u32 [#allocation2], 4
      %s23 = int_to_ptr.vmem [resolvable:$true] %s22
      %25 = dma.hbm_to_vmem [thread:$0]  %s21, 128, %s23, [#allocation3]
    $region5: #{tpu_custom_call.1} parent=1 // pred_fallthru
      _
    // Predicated region
    $region6: #{tpu_custom_call.1} parent=1 // pred_check
      _
    $region7: #{tpu_custom_call.1} parent=1 // pred_check_branch
      %27 = sbr.rel (0) target = $region9
    $region8: #{tpu_custom_call.1} parent=1 // pred_region
      %29 = vsyncadd [#allocation6], 0
      %s30 = sshll.u32 %s1, 4
      %s31 = int_to_ptr.hbm [resolvable:$true] %s30
      %s32 = sshll.u32 [#allocation5], 4
      %s33 = int_to_ptr.vmem [resolvable:$true] %s32
      %38 = dma.hbm_to_vmem [thread:$0]  %s31, 768, %s33, [#allocation6], 192, 192, 12
    $region9: #{tpu_custom_call.1} parent=1 // pred_fallthru
      _
    // Predicated region
    $region10: #{tpu_custom_call.1} parent=1 // pred_check
      _
    $region11: #{tpu_custom_call.1} parent=1 // pred_check_branch
      %40 = sbr.rel (0) target = $region13
    $region12: #{tpu_custom_call.1} parent=1 // pred_region
      %42 = vsyncadd [#allocation6], 0
      %s44 = sshll.u32 %s2, 4
      %s45 = int_to_ptr.hbm [resolvable:$true] %s44
      %s46 = sshll.u32 [#allocation7], 4
      %s47 = int_to_ptr.vmem [resolvable:$true] %s46
      %49 = dma.hbm_to_vmem [thread:$0]  %s45, 48, %s47, [#allocation6]
    $region13: #{tpu_custom_call.1} parent=1 // pred_fallthru
      _
    // Predicated region
    $region14: #{tpu_custom_call.1} parent=1 // pred_check
      _
    $region15: #{tpu_custom_call.1} parent=1 // pred_check_branch
      %51 = sbr.rel (0) target = $region17
    $region16: #{tpu_custom_call.1} parent=1 // pred_region
      %53 = dma.done [#allocation3], 128
    $region17: #{tpu_custom_call.1} parent=1 // pred_fallthru
      _
    // Predicated region
    $region18: #{tpu_custom_call.1} parent=1 // pred_check
      _
    $region19: #{tpu_custom_call.1} parent=1 // pred_check_branch
      %55 = sbr.rel (0) target = $region21
    $region20: #{tpu_custom_call.1} parent=1 // pred_region
      %57 = dma.done [#allocation6], 768
    $region21: #{tpu_custom_call.1} parent=1 // pred_fallthru
      _
    // Predicated region
    $region22: #{tpu_custom_call.1} parent=1 // pred_check
      _
    $region23: #{tpu_custom_call.1} parent=1 // pred_check_branch
      %59 = sbr.rel (0) target = $region25
    $region24: #{tpu_custom_call.1} parent=1 // pred_region
      %61 = dma.done [#allocation6], 48
    $region25: #{tpu_custom_call.1} parent=1 // pred_fallthru
      _
    %v63 = vld [vmem:[#allocation2] sm:$0xff]
    %v64 = vpack.c.bf16 %v63, %v63
    %v65 = vld [vmem:[#allocation5] sm:$0xff]
    %v66 = vld [vmem:[#allocation5 + $0x8] sm:$0xf]
    %v67 = vld [vmem:[#allocation5 + $0xc] sm:$0xff]
    %v68 = vld [vmem:[#allocation5 + $0x14] sm:$0xf]
    %v69 = vld [vmem:[#allocation5 + $0x18] sm:$0xff]
    %v70 = vld [vmem:[#allocation5 + $0x20] sm:$0xf]
    %v71 = vld [vmem:[#allocation5 + $0x24] sm:$0xff]
    %v72 = vld [vmem:[#allocation5 + $0x2c] sm:$0xf]
    %v73 = vld [vmem:[#allocation7] sm:$0x7]
    %v75 = vperm.slane %v73, 0
    %v76 = vperm.slane %v73, 1
    %v77 = vperm.slane %v73, 2
    %v89 = vunpack.c.l.b16 %v65
    %v90 = vunpack.c.h.b16 %v65
    %v91 = vunpack.c.l.b16 %v66
    %v92 = vunpack.c.l.b16 %v67
    %v93 = vunpack.c.h.b16 %v67
    %v94 = vunpack.c.l.b16 %v68
    %v95 = vunpack.c.l.b16 %v69
    %v96 = vunpack.c.h.b16 %v69
    %v97 = vunpack.c.l.b16 %v70
    %v98 = vunpack.c.l.b16 %v71
    %v99 = vunpack.c.h.b16 %v71
    %v100 = vunpack.c.l.b16 %v72
    %v101 = vpack.c.b16 %v92, %v89
    %v102 = vpack.c.b16 %v93, %v90
    %v103 = vpack.c.b16 %v94, %v91
    %v104 = vpack.c.b16 %v98, %v95
    %v105 = vpack.c.b16 %v99, %v96
    %v106 = vpack.c.b16 %v100, %v97
    %vm113 = vcmask 261120
    %v115 = vsel %vm113, %v64, 0
    %117 = vmatpush.bf16.msra.mxu0 0
    %118 = vmatpush.bf16.msra.mxu0 0
    %119 = vmatpush.bf16.msra.mxu0 0
    %120 = vmatpush.bf16.msra.mxu0 0
    %121 = vmatpush.bf16.msra.mxu0 0
    %122 = vmatpush.bf16.msra.mxu0 0
    %123 = vmatpush.bf16.msra.mxu0 %v104
    %124 = vmatpush.bf16.msra.mxu0 %v101
    %125 = vmatmul.bf16.gmra.mxu0 %v115
    %v126 = vpop.f32.mrf.mxu0
    %v127 = vadd.f32 %v75, %v126
    %v128 = vpop.f32.mrf.mxu0
    %129 = vdwg.mxu0
    %130 = vmatpush.bf16.msra.mxu0 0
    %131 = vmatpush.bf16.msra.mxu0 0
    %132 = vmatpush.bf16.msra.mxu0 0
    %133 = vmatpush.bf16.msra.mxu0 0
    %134 = vmatpush.bf16.msra.mxu0 0
    %135 = vmatpush.bf16.msra.mxu0 0
    %136 = vmatpush.bf16.msra.mxu0 %v105
    %137 = vmatpush.bf16.msra.mxu0 %v102
    %138 = vmatmul.bf16.gmra.mxu0 %v115
    %v139 = vpop.f32.mrf.mxu0
    %v140 = vadd.f32 %v76, %v139
    %v141 = vpop.f32.mrf.mxu0
    %142 = vdwg.mxu0
    %143 = vmatpush.bf16.msra.mxu0 0
    %144 = vmatpush.bf16.msra.mxu0 0
    %145 = vmatpush.bf16.msra.mxu0 0
    %146 = vmatpush.bf16.msra.mxu0 0
    %147 = vmatpush.bf16.msra.mxu0 0
    %148 = vmatpush.bf16.msra.mxu0 0
    %149 = vmatpush.bf16.msra.mxu0 %v106
    %150 = vmatpush.bf16.msra.mxu0 %v103
    %151 = vmatmul.bf16.gmra.mxu0 %v115
    %v152 = vpop.f32.mrf.mxu0
    %v153 = vadd.f32 %v77, %v152
    %v154 = vpop.f32.mrf.mxu0
    %155 = vdwg.mxu0
    %156 = vst [vmem:[#allocation8] sm:$0xff] %v127
    %157 = vst [vmem:[#allocation9] sm:$0xff] %v140
    %158 = vst [vmem:[#allocation11] sm:$0xff] %v153
    // Predicated region
    $region26: #{tpu_custom_call.1} parent=1 // pred_check
      _
    $region27: #{tpu_custom_call.1} parent=1 // pred_check_branch
      %160 = sbr.rel (0) target = $region29
    $region28: #{tpu_custom_call.1} parent=1 // pred_region
      %162 = vsyncadd [#allocation4], 0
      %s164 = sshll.u32 [#allocation8], 4
      %s165 = int_to_ptr.vmem [resolvable:$true] %s164
      %s166 = sshll.u32 %s3, 4
      %s167 = int_to_ptr.hbm [resolvable:$true] %s166
      %169 = dma.vmem_to_hbm [thread:$0]  %s165, 128, %s167, [#allocation4]
    $region29: #{tpu_custom_call.1} parent=1 // pred_fallthru
      _
    // Predicated region
    $region30: #{tpu_custom_call.1} parent=1 // pred_check
      _
    $region31: #{tpu_custom_call.1} parent=1 // pred_check_branch
      %171 = sbr.rel (0) target = $region33
    $region32: #{tpu_custom_call.1} parent=1 // pred_region
      %173 = vsyncadd [#allocation10], 0
      %s175 = sshll.u32 [#allocation9], 4
      %s176 = int_to_ptr.vmem [resolvable:$true] %s175
      %s177 = sshll.u32 %s4, 4
      %s178 = int_to_ptr.hbm [resolvable:$true] %s177
      %180 = dma.vmem_to_hbm [thread:$0]  %s176, 128, %s178, [#allocation10]
    $region33: #{tpu_custom_call.1} parent=1 // pred_fallthru
      _
    // Predicated region
    $region34: #{tpu_custom_call.1} parent=1 // pred_check
      _
    $region35: #{tpu_custom_call.1} parent=1 // pred_check_branch
      %182 = sbr.rel (0) target = $region37
    $region36: #{tpu_custom_call.1} parent=1 // pred_region
      %184 = vsyncadd [#allocation10], 0
      %s186 = sshll.u32 [#allocation11], 4
      %s187 = int_to_ptr.vmem [resolvable:$true] %s186
      %s188 = sshll.u32 %s5, 4
      %s189 = int_to_ptr.hbm [resolvable:$true] %s188
      %191 = dma.vmem_to_hbm [thread:$0]  %s187, 128, %s189, [#allocation10]
    $region37: #{tpu_custom_call.1} parent=1 // pred_fallthru
      _
    // Predicated region
    $region38: #{tpu_custom_call.1} parent=1 // pred_check
      _
    $region39: #{tpu_custom_call.1} parent=1 // pred_check_branch
      %193 = sbr.rel (0) target = $region41
    $region40: #{tpu_custom_call.1} parent=1 // pred_region
      %195 = dma.done [#allocation4], 128
    $region41: #{tpu_custom_call.1} parent=1 // pred_fallthru
      _
    // Predicated region
    $region42: #{tpu_custom_call.1} parent=1 // pred_check
      _
    $region43: #{tpu_custom_call.1} parent=1 // pred_check_branch
      %197 = sbr.rel (0) target = $region45
    $region44: #{tpu_custom_call.1} parent=1 // pred_region
      %199 = dma.done [#allocation10], 128
    $region45: #{tpu_custom_call.1} parent=1 // pred_fallthru
      _
    // Predicated region
    $region46: #{tpu_custom_call.1} parent=1 // pred_check
      _
    $region47: #{tpu_custom_call.1} parent=1 // pred_check_branch
      %201 = sbr.rel (0) target = $region49
    $region48: #{tpu_custom_call.1} parent=1 // pred_region
      %203 = dma.done [#allocation10], 128
    $region49: #{tpu_custom_call.1} parent=1 // pred_fallthru
      _
    %204 = vsyncpa [#allocation3], 1
    %205 = vsyncpa [#allocation6], 1
    %206 = vsyncpa [#allocation4], 1
    %207 = vsyncpa [#allocation10], 1

</llo_original>
